<compile_context>
chip_gen: v6e
topology: v6e:2x2x1
jax: 0.10.0
libtpu: 0.0.40
codegen_flags: <defaults>
</compile_context>

<pallas_src>
import jax
import jax.numpy as jnp
from jax.experimental import pallas as pl
from jax.experimental.pallas import tpu as pltpu


def _round_up(x, m):
    return ((x + m - 1) // m) * m


def _plca_kernel(norm_ref, w_ref, ht_ref, z_ref, o_ref):
    # norm_ref: SMEM scalar-prefetch, shape (1,) f32
    # w_ref : (tf, R)  template tile
    # ht_ref: (R, tn)  activations, rank-major -> lane-dense in N, direct MXU RHS
    # z_ref : (1, R)   latent vector; `norm` folded here (O(tf*R), not O(tf*tn))
    # o_ref : (tf, tn) output tile (masked vst on ragged edge blocks)
    wz = w_ref[...] * (z_ref[...] * norm_ref[0])               # VPU, small
    o_ref[...] = jnp.dot(
        wz, ht_ref[...],                                       # (tf,R)@(R,tn) on MXU
        preferred_element_type=jnp.float32,                    # f32 accumulation
    ).astype(o_ref.dtype)


def plca_forward(H, W, Z, norm=None, *, tile_f=512, tile_n=2048, out_dtype=None):
    """Pallas equivalent of BaseComponent.forward for the 2-D PLCA reconstruct:
       out = (W * Z) @ H.T * norm,  W:(F,R), H:(N,R), Z:(R,)  ->  (F, N)."""
    F_, R = W.shape
    N, R2 = H.shape
    assert R == R2 == Z.shape[0]
    out_dtype = jnp.float32 if out_dtype is None else jnp.dtype(out_dtype)

    W = W.astype(jnp.float32)
    HT = H.astype(jnp.float32).T                   # (R, N): rank-major once, in the wrapper
    z2 = Z.astype(jnp.float32).reshape(1, R)
    # TODO(synk): torchnmf allows `norm` to be a tensor broadcast over the (F, N)
    # output; only a scalar norm is supported by this SMEM fold.
    norm_arr = jnp.asarray([1.0 if norm is None else norm], dtype=jnp.float32)

    # Tile granules: lane dim multiple of 128; sublane dim multiple of 8
    # (16 when the output is a 2-byte dtype, for sublane packing).
    f_gran = 16 if jnp.dtype(out_dtype).itemsize == 2 else 8
    tf = min(_round_up(F_, f_gran), max(f_gran, _round_up(tile_f, f_gran)))
    tn = min(_round_up(N, 128), max(128, _round_up(tile_n, 128)))

    # Megacore (v7x has 2 TCs): avoid a (1,1) grid when the problem is splittable.
    if pl.cdiv(F_, tf) * pl.cdiv(N, tn) == 1:
        if N > 128:
            tn = _round_up(pl.cdiv(N, 2), 128)
        elif F_ > f_gran:
            tf = _round_up(pl.cdiv(F_, 2), f_gran)

    # VMEM budget: double-buffered output + W (lane-padded to 128) + HT tiles.
    # ~40 MiB keeps headroom on v7x's 64 MiB/TC and is trivially safe on v5e/v6e.
    def _footprint(tf_, tn_):
        out_b = 2 * tf_ * tn_ * jnp.dtype(out_dtype).itemsize
        w_b = 2 * tf_ * max(128, _round_up(R, 128)) * 4
        ht_b = 2 * max(8, _round_up(R, 8)) * tn_ * 4
        return out_b + w_b + ht_b

    budget = 40 << 20
    while _footprint(tf, tn) > budget and tn > 128:
        tn = _round_up(tn // 2, 128)
    while _footprint(tf, tn) > budget and tf > f_gran:
        tf = _round_up(tf // 2, f_gran)

    grid = (pl.cdiv(F_, tf), pl.cdiv(N, tn))

    out = pl.pallas_call(
        _plca_kernel,
        out_shape=jax.ShapeDtypeStruct((F_, N), out_dtype),   # no padding, no slice-off
        grid_spec=pltpu.PrefetchScalarGridSpec(
            num_scalar_prefetch=1,                             # `norm` lands in SMEM
            grid=grid,
            in_specs=[
                pl.BlockSpec((tf, R), lambda i, j, *_: (i, 0)),  # W tile (reused over j)
                pl.BlockSpec((R, tn), lambda i, j, *_: (0, j)),  # H^T tile (reused over i)
                pl.BlockSpec((1, R), lambda i, j, *_: (0, 0)),   # Z row vector
            ],
            out_specs=pl.BlockSpec((tf, tn), lambda i, j, *_: (i, j)),
        ),
        compiler_params=pltpu.CompilerParams(
            dimension_semantics=("parallel", "parallel"),      # megacore-shardable on v7x
            vmem_limit_bytes=48 << 20,                         # safe on v5e/v6e/v7x (64 MiB/TC)
        ),
    )(norm_arr, W, HT, z2)
    return out


def init_plca_params(key, out_channels, rank, n_frames):
    """Deterministic synthetic init mirroring BaseComponent.__init__."""
    kw, kh = jax.random.split(key)
    W = jnp.abs(jax.random.normal(kw, (out_channels, rank), dtype=jnp.float32))
    H = jnp.abs(jax.random.normal(kh, (n_frames, rank), dtype=jnp.float32))
    # get_norm: sum over all dims except dim 1, keepdim -> per-column normalization
    W = W / jnp.sum(W, axis=0, keepdims=True)
    H = H / jnp.sum(H, axis=0, keepdims=True)
    Z = jnp.ones((rank,), dtype=jnp.float32) / rank
    Z = Z / jnp.sum(Z)
    return W, H, Z


if __name__ == "__main__":
    key = jax.random.PRNGKey(0)
    out_channels, rank, n_frames = 200, 8, 384   # ragged F (and ragged N vs tiles)
    W, H, Z = init_plca_params(key, out_channels, rank, n_frames)

    # pure-JAX reference of the forward pass
    norm = 3.5
    ref = (W * Z) @ H.T * norm

    # small tiles -> (2, 3) grid with ragged edge blocks (masked stores, no padding)
    out = plca_forward(H, W, Z, norm=norm, tile_f=128, tile_n=128)
    out = jax.block_until_ready(out)
    assert out.shape == (out_channels, n_frames)
    assert jnp.allclose(out, ref, rtol=1e-4, atol=1e-6)

    # default (large) tiles, norm=None path (returns un-scaled reconstruction)
    out_nonorm = jax.block_until_ready(plca_forward(H, W, Z))
    assert out_nonorm.shape == (out_channels, n_frames)
    assert jnp.allclose(out_nonorm, (W * Z) @ H.T, rtol=1e-4, atol=1e-6)

    # bf16 output path (halves the dominant HBM output write; f32 MXU accumulation)
    out_bf16 = jax.block_until_ready(
        plca_forward(H, W, Z, norm=norm, out_dtype=jnp.bfloat16))
    assert out_bf16.dtype == jnp.bfloat16
    assert jnp.allclose(out_bf16.astype(jnp.float32), ref, rtol=2e-2, atol=2e-2)

    print("KERNEL_OK")
</pallas_src>

<mosaic_0001>
module attributes {stable_mosaic.version = 11 : i64} {
  func.func @_plca_kernel(%arg0: i32, %arg1: i32, %arg2: memref<1xf32, #tpu.memory_space<smem>>, %arg3: memref<128x8xf32, #tpu.memory_space<vmem>>, %arg4: memref<8x128xf32, #tpu.memory_space<vmem>>, %arg5: memref<1x8xf32, #tpu.memory_space<vmem>>, %arg6: memref<128x128xf32, #tpu.memory_space<vmem>>) attributes {dimension_semantics = [#tpu.dimension_semantics<parallel>, #tpu.dimension_semantics<parallel>], iteration_bounds = array<i64: 2, 3>, scalar_prefetch = 1 : i64, scratch_operands = 0 : i64, tpu.core_type = #tpu.core_type<tc>, window_params = [{transform_indices = @transform_0, window_bounds = array<i64: 128, 8>}, {transform_indices = @transform_1, window_bounds = array<i64: 8, 128>}, {pipeline_mode = #tpu.pipeline_mode<synchronous>, transform_indices = @transform_2, window_bounds = array<i64: 1, 8>}, {transform_indices = @transform_3, window_bounds = array<i64: 128, 128>}]} {
    %c0 = arith.constant 0 : index
    %c0_0 = arith.constant 0 : index
    %0 = vector.load %arg3[%c0, %c0_0] : memref<128x8xf32, #tpu.memory_space<vmem>>, vector<128x8xf32>
    %c0_1 = arith.constant 0 : index
    %c0_2 = arith.constant 0 : index
    %1 = vector.load %arg5[%c0_1, %c0_2] : memref<1x8xf32, #tpu.memory_space<vmem>>, vector<1x8xf32>
    %c0_3 = arith.constant 0 : index
    %2 = memref.load %arg2[%c0_3] : memref<1xf32, #tpu.memory_space<smem>>
    %3 = vector.broadcast %2 : f32 to vector<1x8xf32>
    %4 = arith.mulf %1, %3 : vector<1x8xf32>
    %5 = vector.broadcast %4 : vector<1x8xf32> to vector<128x8xf32>
    %6 = arith.mulf %0, %5 : vector<128x8xf32>
    %c0_4 = arith.constant 0 : index
    %c0_5 = arith.constant 0 : index
    %7 = vector.load %arg4[%c0_4, %c0_5] : memref<8x128xf32, #tpu.memory_space<vmem>>, vector<8x128xf32>
    %cst = arith.constant dense<0.000000e+00> : vector<128x128xf32>
    %8 = tpu.matmul %6, %7, %cst {dimension_numbers = #tpu.dot_dimension_numbers<[1], [0], [0], [1], [0, 0, 1, 1], [], []>} : vector<128x8xf32>, vector<8x128xf32>, vector<128x128xf32> -> vector<128x128xf32>
    %c0_6 = arith.constant 0 : index
    %c0_7 = arith.constant 0 : index
    %9 = vector.load %arg6[%c0_6, %c0_7] : memref<128x128xf32, #tpu.memory_space<vmem>>, vector<128x128xf32>
    tpu.vector_store %arg6[%c0_6, %c0_7], %8 {strides = array<i32>} : memref<128x128xf32, #tpu.memory_space<vmem>>, vector<128x128xf32>,
    return
  }
  func.func @transform_0(%arg0: i32, %arg1: i32, %arg2: memref<1xf32, #tpu.memory_space<smem>>) -> (i32, i32) {
    %c0_i32 = arith.constant 0 : i32
    %c0_i32_0 = arith.constant 0 : i32
    return %arg0, %c0_i32 : i32, i32
  }
  func.func @transform_1(%arg0: i32, %arg1: i32, %arg2: memref<1xf32, #tpu.memory_space<smem>>) -> (i32, i32) {
    %c0_i32 = arith.constant 0 : i32
    %c0_i32_0 = arith.constant 0 : i32
    return %c0_i32, %arg1 : i32, i32
  }
  func.func @transform_2(%arg0: i32, %arg1: i32, %arg2: memref<1xf32, #tpu.memory_space<smem>>) -> (i32, i32) {
    %c0_i32 = arith.constant 0 : i32
    %c0_i32_0 = arith.constant 0 : i32
    %c0_i32_1 = arith.constant 0 : i32
    return %c0_i32, %c0_i32_0 : i32, i32
  }
  func.func @transform_3(%arg0: i32, %arg1: i32, %arg2: memref<1xf32, #tpu.memory_space<smem>>) -> (i32, i32) {
    %c0_i32 = arith.constant 0 : i32
    return %arg0, %arg1 : i32, i32
  }
}

</mosaic_0001>

<llo_original>
// kernel: tpu_custom_call.1
$region0: #{tpu_custom_call.1}
  #allocation0 [shape = 'u32[]', space=smem, size = 0x4, offset = 0x4, fixed_abs, tag = 'smem constant byte address 0x4 - core index']
  #allocation1 [shape = 'u32[144,128]{1,0:T(1,128)}', space=vmem, size = 0x12000, scoped, tag = 'internal scratch']
  #allocation2 [shape = 's32[1]{0}', space=sflag, size = 0x4, scoped, tag = 'scoped memory for tpu_custom_call.1']
  #allocation3 [shape = 'f32[1]{0:T(128)S(6)}', space=smem, size = 0x200, scoped, tag = 'prefetched SMEM operand 0']
  %s0 = inlined_call_operand.<no memory space> [shape: f32[1], index: 0, kind: input, shape index: {}]
  %s1 = inlined_call_operand.vmem [shape: f32[200,8], index: 1, kind: input, shape index: {}]
  %s2 = inlined_call_operand.vmem [shape: f32[8,384], index: 2, kind: input, shape index: {}]
  %s3 = inlined_call_operand.vmem [shape: f32[1,8], index: 3, kind: input, shape index: {}]
  %s4 = inlined_call_operand.hbm [shape: f32[200,384], index: 4, kind: output, shape index: {}]
  %s5 = sld [smem:[#allocation0]]
  $region45: #{tpu_custom_call.1} parent=0
    _
  %s7 = ssub.s32 1, %s5
  %s8 = scalar_select 0, %s7, %s5
  %9 = sst [smem:[#allocation3]] %s0
  $region1: #{tpu_custom_call.1} parent=0
    #allocation4 [shape = 'u8[131072]{0}', space=vmem, size = 0x20000, scoped, tag = 'output window, operand 0']
    #allocation5 [shape = 's32[2]{0}', space=sflag, size = 0x8, scoped, tag = 'scoped memory for tpu_custom_call.1']
    %10 = vsyncpa [#allocation5], 0
    %s11 = scalar_lea.sflag [#allocation5], 1
    %12 = vsyncpa %s11, 0
    loop: start=0, step=1, limit=8
    $region2: #{tpu_custom_call.1} parent=1 // loop_pre_header
      _
    $region3: #{tpu_custom_call.1} parent=1 // loop_header
      %s14 = sphi 0, %s18
      %p15 = scmp.ge.s32.totalorder %s14, 8
      %s21 = sphi 0, %s33
      %s22 = sphi 0, %s29
      %s23 = sphi 0, %s21
      %s24 = sphi 0, %s22
      %s25 = sphi 0, %s23
      %s26 = sphi 0, %s24
      %s36 = sphi 0, %s38
      %s39 = sphi 0, %s36
      %s40 = sphi 0, %s39
      %s56 = sphi 0, %s40
      %s62 = sphi 0, %s64
      %s65 = sphi 0, %s62
      %s66 = sphi 0, %s65
      %s82 = sphi 0, %s66
      %s86 = sphi 0, %s86
      %s88 = sphi 0, %s86
      %s89 = sphi 0, %s88
      %s103 = sphi 0, %s89
      %s111 = sphi 0, %s113
      %s114 = sphi 0, %s111
      %s115 = sphi 0, %s114
      %s131 = sphi 0, %s115
    $region4: #{tpu_custom_call.1} parent=1 // loop_header_branch
      %17 = sbr.rel (%p15) target = $region8
    $region5: #{tpu_custom_call.1} parent=1 // loop_body
      %s19 = ssub.s32 %s14, 1
      %s20 = ssub.s32 %s14, 2
      %s27 = sadd.s32 1, %s22
      %p28 = scmp.ge.s32.totalorder %s27, 3
      %s29 = scalar_select %p28, 0, %s27
      %s30 = sadd.s32 1, %s21
      %s31 = scalar_select %p28, %s30, %s21
      %p32 = scmp.ge.s32.totalorder %s31, 2
      %s33 = scalar_select %p32, 0, %s31
      %s34 = ssub.s32 %s21, %s33
      %p35 = scmp.eq.s32.totalorder %s34, 0
      %s37 = sadd.s32 %s36, 1
      %s38 = scalar_select %p35, %s36, %s37
      %p41 = pneg %p35
      %p42 = scmp.eq.s32.totalorder %s14, 5
      %p43 = por %p41, %p42
      %p44 = scmp.ne.s32.totalorder %s36, %s39
      %p45 = scmp.eq.s32.totalorder %s14, 0
      %p46 = por %p44, %p45
      %p47 = scmp.ne.s32.totalorder %s36, %s39
      %p48 = scmp.eq.s32.totalorder %s19, 5
      %p49 = por %p47, %p48
      %p50 = scmp.ne.s32.totalorder %s39, %s40
      %p51 = scmp.eq.s32.totalorder %s19, 0
      %p52 = por %p50, %p51
      %p53 = scmp.ne.s32.totalorder %s39, %s40
      %p54 = scmp.eq.s32.totalorder %s20, 5
      %p55 = por %p53, %p54
      %p57 = scmp.ne.s32.totalorder %s40, %s56
      %p58 = scmp.eq.s32.totalorder %s20, 0
      %p59 = por %p57, %p58
      %s60 = ssub.s32 %s22, %s29
      %p61 = scmp.eq.s32.totalorder %s60, 0
      %s63 = sadd.s32 %s62, 1
      %s64 = scalar_select %p61, %s62, %s63
      %p67 = pneg %p61
      %p68 = scmp.eq.s32.totalorder %s14, 5
      %p69 = por %p67, %p68
      %p70 = scmp.ne.s32.totalorder %s62, %s65
      %p71 = scmp.eq.s32.totalorder %s14, 0
      %p72 = por %p70, %p71
      %p73 = scmp.ne.s32.totalorder %s62, %s65
      %p74 = scmp.eq.s32.totalorder %s19, 5
      %p75 = por %p73, %p74
      %p76 = scmp.ne.s32.totalorder %s65, %s66
      %p77 = scmp.eq.s32.totalorder %s19, 0
      %p78 = por %p76, %p77
      %p79 = scmp.ne.s32.totalorder %s65, %s66
      %p80 = scmp.eq.s32.totalorder %s20, 5
      %p81 = por %p79, %p80
      %p83 = scmp.ne.s32.totalorder %s66, %s82
      %p84 = scmp.eq.s32.totalorder %s20, 0
      %p85 = por %p83, %p84
      %s87 = sadd.s32 %s86, 1
      %p90 = scmp.eq.s32.totalorder %s14, 5
      %p91 = scmp.ne.s32.totalorder %s86, %s88
      %p92 = scmp.eq.s32.totalorder %s14, 0
      %p93 = por %p91, %p92
      %p94 = scmp.ne.s32.totalorder %s86, %s88
      %p95 = scmp.eq.s32.totalorder %s19, 5
      %p96 = por %p94, %p95
      %p97 = scmp.ne.s32.totalorder %s88, %s89
      %p98 = scmp.eq.s32.totalorder %s19, 0
      %p99 = por %p97, %p98
      %p100 = scmp.ne.s32.totalorder %s88, %s89
      %p101 = scmp.eq.s32.totalorder %s20, 5
      %p102 = por %p100, %p101
      %p104 = scmp.ne.s32.totalorder %s89, %s103
      %p105 = scmp.eq.s32.totalorder %s20, 0
      %p106 = por %p104, %p105
      %s107 = ssub.s32 %s21, %s33
      %s108 = ssub.s32 %s22, %s29
      %s109 = sor.u32 %s107, %s108
      %p110 = scmp.eq.s32.totalorder %s109, 0
      %s112 = sadd.s32 %s111, 1
      %s113 = scalar_select %p110, %s111, %s112
      %p116 = pneg %p110
      %p117 = scmp.eq.s32.totalorder %s14, 5
      %p118 = por %p116, %p117
      %p119 = scmp.ne.s32.totalorder %s111, %s114
      %p120 = scmp.eq.s32.totalorder %s14, 0
      %p121 = por %p119, %p120
      %p122 = scmp.ne.s32.totalorder %s111, %s114
      %p123 = scmp.eq.s32.totalorder %s19, 5
      %p124 = por %p122, %p123
      %p125 = scmp.ne.s32.totalorder %s114, %s115
      %p126 = scmp.eq.s32.totalorder %s19, 0
      %p127 = por %p125, %p126
      %p128 = scmp.ne.s32.totalorder %s114, %s115
      %p129 = scmp.eq.s32.totalorder %s20, 5
      %p130 = por %p128, %p129
      %p132 = scmp.ne.s32.totalorder %s115, %s131
      %p133 = scmp.eq.s32.totalorder %s20, 0
      %p134 = por %p132, %p133
      %p135 = scmp.le.s32.totalorder 1, %s14
      %p136 = scmp.lt.s32.totalorder %s14, 7
      %p137 = pnand %p135, %p136
      %p138 = pneg %p137
      // Predicated region
      $region9: #{tpu_custom_call.1} parent=5 // pred_check
        _
      $region10: #{tpu_custom_call.1} parent=5 // pred_check_branch
        %140 = sbr.rel (%p137) target = $region12
      $region11: #{tpu_custom_call.1} parent=5 // pred_region
        %s141 = ssub.s32 %s14, 1
        // Predicated region
        $region13: #{tpu_custom_call.1} parent=11 // pred_check
          %p142 = pneg %p99
        $region14: #{tpu_custom_call.1} parent=11 // pred_check_branch
          %144 = sbr.rel (%p142) target = $region16
        $region15: #{tpu_custom_call.1} parent=11 // pred_region
          _
        $region16: #{tpu_custom_call.1} parent=11 // pred_fallthru
          _
      $region12: #{tpu_custom_call.1} parent=5 // pred_fallthru
        _
      %p145 = scmp.lt.s32.totalorder %s14, 6
      // Predicated region
      $region17: #{tpu_custom_call.1} parent=5 // pred_check
        %p146 = pneg %p145
      $region18: #{tpu_custom_call.1} parent=5 // pred_check_branch
        %148 = sbr.rel (%p146) target = $region20
      $region19: #{tpu_custom_call.1} parent=5 // pred_region
        // Predicated region
        $region21: #{tpu_custom_call.1} parent=19 // pred_check
          %p149 = pneg %p46
        $region22: #{tpu_custom_call.1} parent=19 // pred_check_branch
          %151 = sbr.rel (%p149) target = $region24
        $region23: #{tpu_custom_call.1} parent=19 // pred_region
          %s152 = smul.u32 16, %s21
          %s153 = ssub.s32 25, %s152
          %p154 = scmp.lt.s32.totalorder %s153, 16
          %s155 = scalar_select %p154, %s153, 16
          %s156 = smul.u32 128, %s155
          %p157 = scmp.lt.s32.totalorder %s152, 24
          %s158 = scalar_select %p157, %s152, 24
          %s159 = smul.addr %s158, 8
          %s160 = scalar_lea.vmem %s1, %s159
          %s161 = smul.u32 16, %s21
          %s162 = ssub.s32 25, %s161
          %p163 = scmp.lt.s32.totalorder %s162, 16
          %s164 = scalar_select %p163, %s162, 16
          %s165 = smul.u32 128, %s164
        $region24: #{tpu_custom_call.1} parent=19 // pred_fallthru
          _
        // Predicated region
        $region25: #{tpu_custom_call.1} parent=19 // pred_check
          %p166 = pneg %p72
        $region26: #{tpu_custom_call.1} parent=19 // pred_check_branch
          %168 = sbr.rel (%p166) target = $region28
        $region27: #{tpu_custom_call.1} parent=19 // pred_region
          %p169 = scmp.lt.s32.totalorder %s22, 2
          %s170 = scalar_select %p169, %s22, 2
          %s171 = smul.addr %s170, 8
          %s172 = scalar_lea.vmem %s2, %s171
        $region28: #{tpu_custom_call.1} parent=19 // pred_fallthru
          _
      $region20: #{tpu_custom_call.1} parent=5 // pred_fallthru
        _
      %p173 = scmp.le.s32.totalorder 1, %s14
      %p174 = scmp.lt.s32.totalorder %s14, 7
      %p175 = pnand %p173, %p174
      %p176 = pneg %p175
      // Predicated region
      $region29: #{tpu_custom_call.1} parent=5 // pred_check
        _
      $region30: #{tpu_custom_call.1} parent=5 // pred_check_branch
        %178 = sbr.rel (%p175) target = $region32
      $region31: #{tpu_custom_call.1} parent=5 // pred_region
        %s179 = ssub.s32 %s14, 1
        %s180 = smul.u32 16, %s23
        %s181 = ssub.s32 25, %s180
        %p182 = scmp.lt.s32.totalorder %s181, 16
        %s183 = scalar_select %p182, %s181, 16
        %s184 = smul.u32 128, %s183
        %p185 = scmp.lt.s32.totalorder %s180, 24
        %s186 = scalar_select %p185, %s180, 24
        %s187 = smul.addr %s186, 8
        %s188 = scalar_lea.vmem %s1, %s187
        %p189 = pneg %p52
        %p190 = pneg %p49
        %p191 = scmp.lt.s32.totalorder %s24, 2
        %s192 = scalar_select %p191, %s24, 2
        %s193 = smul.addr %s192, 8
        %s194 = scalar_lea.vmem %s2, %s193
        %p195 = pneg %p78
        %p196 = pneg %p75
        %p197 = pneg %p99
        %p198 = pneg %p96
        %p199 = pneg %p127
        %p200 = pneg %p124
        %s201 = sand.u32 %s114, 1
        %s202 = scalar_lea.sflag [#allocation5], %s201
        %s203 = sand.u32 %s114, 1
        %s204 = smul.addr %s203, 128
        %s205 = scalar_lea.vmem [#allocation4], %s204
        %s206 = smul.u32 16, %s23
        %s207 = ssub.s32 25, %s206
        %p208 = scmp.lt.s32.totalorder %s207, 16
        %s209 = scalar_select %p208, %s207, 16
        %s210 = smul.u32 128, %s209
        %p211 = scmp.lt.s32.totalorder %s206, 24
        %s212 = scalar_select %p211, %s206, 24
        %s213 = smul.addr %s212, 8
        %s214 = scalar_lea.vmem %s1, %s213
        %s215 = smul.u32 16, %s23
        %s216 = ssub.s32 25, %s215
        %p217 = scmp.lt.s32.totalorder %s216, 16
        %s218 = scalar_select %p217, %s216, 16
        %s219 = smul.u32 128, %s218
        %p220 = scmp.lt.s32.totalorder %s24, 2
        %s221 = scalar_select %p220, %s24, 2
        %s222 = smul.addr %s221, 8
        %s223 = scalar_lea.vmem %s2, %s222
        %s224 = smul.u32 16, %s23
        %s225 = ssub.s32 25, %s224
        %p226 = scmp.lt.s32.totalorder %s225, 16
        %s227 = scalar_select %p226, %s225, 16
        %s228 = smul.u32 128, %s227
        %v229 = vld [vmem:[%s214] sm:$0xff]
        %v230 = vld [vmem:[%s214 + $0x8] sm:$0xff]
        %v231 = vld [vmem:[%s214 + $0x10] sm:$0xff]
        %v232 = vld [vmem:[%s214 + $0x18] sm:$0xff]
        %v233 = vld [vmem:[%s214 + $0x20] sm:$0xff]
        %v234 = vld [vmem:[%s214 + $0x28] sm:$0xff]
        %v235 = vld [vmem:[%s214 + $0x30] sm:$0xff]
        %v236 = vld [vmem:[%s214 + $0x38] sm:$0xff]
        %v237 = vld [vmem:[%s214 + $0x40] sm:$0xff]
        %v238 = vld [vmem:[%s214 + $0x48] sm:$0xff]
        %v239 = vld [vmem:[%s214 + $0x50] sm:$0xff]
        %v240 = vld [vmem:[%s214 + $0x58] sm:$0xff]
        %v241 = vld [vmem:[%s214 + $0x60] sm:$0xff]
        %v242 = vld [vmem:[%s214 + $0x68] sm:$0xff]
        %v243 = vld [vmem:[%s214 + $0x70] sm:$0xff]
        %v244 = vld [vmem:[%s214 + $0x78] sm:$0xff]
        %v245 = vld [vmem:[%s3] sm:$0x1]
        %s246 = sld [smem:[#allocation3]]
        %v247 = vstv %s246
        %v248 = vmul.f32 %v245, %v247
        %v250 = vlaneseq
        %v251 = vshrl.u32 %v250, 7
        %v252 = vsub.s32 0, %v251
        %v253 = vrot.slane %v248, %v252
        %v255 = vmul.f32 %v229, %v253
        %v256 = vmul.f32 %v230, %v253
        %v257 = vmul.f32 %v231, %v253
        %v258 = vmul.f32 %v232, %v253
        %v259 = vmul.f32 %v233, %v253
        %v260 = vmul.f32 %v234, %v253
        %v261 = vmul.f32 %v235, %v253
        %v262 = vmul.f32 %v236, %v253
        %v263 = vmul.f32 %v237, %v253
        %v264 = vmul.f32 %v238, %v253
        %v265 = vmul.f32 %v239, %v253
        %v266 = vmul.f32 %v240, %v253
        %v267 = vmul.f32 %v241, %v253
        %v268 = vmul.f32 %v242, %v253
        %v269 = vmul.f32 %v243, %v253
        %v270 = vmul.f32 %v244, %v253
        %v271 = vld [vmem:[%s223] sm:$0xff]
        %vm272 = vcmask 64512
        %v274 = vsel %vm272, %v255, 0
        %v277 = vsel %vm272, %v256, 0
        %v280 = vsel %vm272, %v257, 0
        %v283 = vsel %vm272, %v258, 0
        %v286 = vsel %vm272, %v259, 0
        %v289 = vsel %vm272, %v260, 0
        %v292 = vsel %vm272, %v261, 0
        %v295 = vsel %vm272, %v262, 0
        %v298 = vsel %vm272, %v263, 0
        %v301 = vsel %vm272, %v264, 0
        %v304 = vsel %vm272, %v265, 0
        %v307 = vsel %vm272, %v266, 0
        %v310 = vsel %vm272, %v267, 0
        %v313 = vsel %vm272, %v268, 0
        %v316 = vsel %vm272, %v269, 0
        %v319 = vsel %vm272, %v270, 0
        %321 = vmatprep.subr.mxu0 0.0
        %322 = vmatpush1.msra.mxu0 0.0
        %323 = vmatprep.subr.mxu0 0.0
        %324 = vmatpush1.msra.mxu0 0.0
        %325 = vmatprep.subr.mxu0 0.0
        %326 = vmatpush1.msra.mxu0 0.0
        %327 = vmatprep.subr.mxu0 0.0
        %328 = vmatpush1.msra.mxu0 0.0
        %329 = vmatprep.subr.mxu0 0.0
        %330 = vmatpush1.msra.mxu0 0.0
        %331 = vmatprep.subr.mxu0 0.0
        %332 = vmatpush1.msra.mxu0 0.0
        %333 = vmatprep.subr.mxu0 0.0
        %334 = vmatpush1.msra.mxu0 0.0
        %335 = vmatprep.subr.mxu0 0.0
        %336 = vmatpush1.msra.mxu0 0.0
        %337 = vmatprep.subr.mxu0 0.0
        %338 = vmatpush1.msra.mxu0 0.0
        %339 = vmatprep.subr.mxu0 0.0
        %340 = vmatpush1.msra.mxu0 0.0
        %341 = vmatprep.subr.mxu0 0.0
        %342 = vmatpush1.msra.mxu0 0.0
        %343 = vmatprep.subr.mxu0 0.0
        %344 = vmatpush1.msra.mxu0 0.0
        %345 = vmatprep.subr.mxu0 0.0
        %346 = vmatpush1.msra.mxu0 0.0
        %347 = vmatprep.subr.mxu0 0.0
        %348 = vmatpush1.msra.mxu0 0.0
        %349 = vmatprep.subr.mxu0 0.0
        %350 = vmatpush1.msra.mxu0 0.0
        %351 = vmatprep.subr.mxu0 0.0
        %352 = vmatpush1.msra.mxu0 %v271
        %353 = vmatprep.subr.mxu0 0.0
        %354 = vmatpush2.msra.mxu0 0.0
        %355 = vmatprep.subr.mxu0 0.0
        %356 = vmatpush2.msra.mxu0 0.0
        %357 = vmatprep.subr.mxu0 0.0
        %358 = vmatpush2.msra.mxu0 0.0
        %359 = vmatprep.subr.mxu0 0.0
        %360 = vmatpush2.msra.mxu0 0.0
        %361 = vmatprep.subr.mxu0 0.0
        %362 = vmatpush2.msra.mxu0 0.0
        %363 = vmatprep.subr.mxu0 0.0
        %364 = vmatpush2.msra.mxu0 0.0
        %365 = vmatprep.subr.mxu0 0.0
        %366 = vmatpush2.msra.mxu0 0.0
        %367 = vmatprep.subr.mxu0 0.0
        %368 = vmatpush2.msra.mxu0 0.0
        %369 = vmatprep.subr.mxu0 0.0
        %370 = vmatpush2.msra.mxu0 0.0
        %371 = vmatprep.subr.mxu0 0.0
        %372 = vmatpush2.msra.mxu0 0.0
        %373 = vmatprep.subr.mxu0 0.0
        %374 = vmatpush2.msra.mxu0 0.0
        %375 = vmatprep.subr.mxu0 0.0
        %376 = vmatpush2.msra.mxu0 0.0
        %377 = vmatprep.subr.mxu0 0.0
        %378 = vmatpush2.msra.mxu0 0.0
        %379 = vmatprep.subr.mxu0 0.0
        %380 = vmatpush2.msra.mxu0 0.0
        %381 = vmatprep.subr.mxu0 0.0
        %382 = vmatpush2.msra.mxu0 0.0
        %383 = vmatprep.subr.mxu0 0.0
        %384 = vmatpush2.msra.mxu0 0.0
        %385 = vmatprep.mubr.f32.mxu0 0.0
        %386 = vmatmul.mubr.f32.gmra.mxu0 %v274
        %v387 = vpop.f32.mrf.mxu0
        %v388 = vadd.f32 0.0, %v387
        %v389 = vpop.f32.mrf.mxu0
        %390 = vmatprep.mubr.f32.mxu0 0.0
        %391 = vmatmul.mubr.f32.gmra.mxu0 %v277
        %v392 = vpop.f32.mrf.mxu0
        %v393 = vadd.f32 0.0, %v392
        %v394 = vpop.f32.mrf.mxu0
        %395 = vmatprep.mubr.f32.mxu0 0.0
        %396 = vmatmul.mubr.f32.gmra.mxu0 %v280
        %v397 = vpop.f32.mrf.mxu0
        %v398 = vadd.f32 0.0, %v397
        %v399 = vpop.f32.mrf.mxu0
        %400 = vmatprep.mubr.f32.mxu0 0.0
        %401 = vmatmul.mubr.f32.gmra.mxu0 %v283
        %v402 = vpop.f32.mrf.mxu0
        %v403 = vadd.f32 0.0, %v402
        %v404 = vpop.f32.mrf.mxu0
        %405 = vmatprep.mubr.f32.mxu0 0.0
        %406 = vmatmul.mubr.f32.gmra.mxu0 %v286
        %v407 = vpop.f32.mrf.mxu0
        %v408 = vadd.f32 0.0, %v407
        %v409 = vpop.f32.mrf.mxu0
        %410 = vmatprep.mubr.f32.mxu0 0.0
        %411 = vmatmul.mubr.f32.gmra.mxu0 %v289
        %v412 = vpop.f32.mrf.mxu0
        %v413 = vadd.f32 0.0, %v412
        %v414 = vpop.f32.mrf.mxu0
        %415 = vmatprep.mubr.f32.mxu0 0.0
        %416 = vmatmul.mubr.f32.gmra.mxu0 %v292
        %v417 = vpop.f32.mrf.mxu0
        %v418 = vadd.f32 0.0, %v417
        %v419 = vpop.f32.mrf.mxu0
        %420 = vmatprep.mubr.f32.mxu0 0.0
        %421 = vmatmul.mubr.f32.gmra.mxu0 %v295
        %v422 = vpop.f32.mrf.mxu0
        %v423 = vadd.f32 0.0, %v422
        %v424 = vpop.f32.mrf.mxu0
        %425 = vmatprep.mubr.f32.mxu0 0.0
        %426 = vmatmul.mubr.f32.gmra.mxu0 %v298
        %v427 = vpop.f32.mrf.mxu0
        %v428 = vadd.f32 0.0, %v427
        %v429 = vpop.f32.mrf.mxu0
        %430 = vmatprep.mubr.f32.mxu0 0.0
        %431 = vmatmul.mubr.f32.gmra.mxu0 %v301
        %v432 = vpop.f32.mrf.mxu0
        %v433 = vadd.f32 0.0, %v432
        %v434 = vpop.f32.mrf.mxu0
        %435 = vmatprep.mubr.f32.mxu0 0.0
        %436 = vmatmul.mubr.f32.gmra.mxu0 %v304
        %v437 = vpop.f32.mrf.mxu0
        %v438 = vadd.f32 0.0, %v437
        %v439 = vpop.f32.mrf.mxu0
        %440 = vmatprep.mubr.f32.mxu0 0.0
        %441 = vmatmul.mubr.f32.gmra.mxu0 %v307
        %v442 = vpop.f32.mrf.mxu0
        %v443 = vadd.f32 0.0, %v442
        %v444 = vpop.f32.mrf.mxu0
        %445 = vmatprep.mubr.f32.mxu0 0.0
        %446 = vmatmul.mubr.f32.gmra.mxu0 %v310
        %v447 = vpop.f32.mrf.mxu0
        %v448 = vadd.f32 0.0, %v447
        %v449 = vpop.f32.mrf.mxu0
        %450 = vmatprep.mubr.f32.mxu0 0.0
        %451 = vmatmul.mubr.f32.gmra.mxu0 %v313
        %v452 = vpop.f32.mrf.mxu0
        %v453 = vadd.f32 0.0, %v452
        %v454 = vpop.f32.mrf.mxu0
        %455 = vmatprep.mubr.f32.mxu0 0.0
        %456 = vmatmul.mubr.f32.gmra.mxu0 %v316
        %v457 = vpop.f32.mrf.mxu0
        %v458 = vadd.f32 0.0, %v457
        %v459 = vpop.f32.mrf.mxu0
        %460 = vmatprep.mubr.f32.mxu0 0.0
        %461 = vmatmul.mubr.f32.gmra.mxu0 %v319
        %v462 = vpop.f32.mrf.mxu0
        %v463 = vadd.f32 0.0, %v462
        %v464 = vpop.f32.mrf.mxu0
        %465 = vdwg.mxu0
        %466 = vst [vmem:[%s205] sm:$0xff] %v388
        %467 = vst [vmem:[%s205 + $0x8] sm:$0xff] %v393
        %468 = vst [vmem:[%s205 + $0x10] sm:$0xff] %v398
        %469 = vst [vmem:[%s205 + $0x18] sm:$0xff] %v403
        %470 = vst [vmem:[%s205 + $0x20] sm:$0xff] %v408
        %471 = vst [vmem:[%s205 + $0x28] sm:$0xff] %v413
        %472 = vst [vmem:[%s205 + $0x30] sm:$0xff] %v418
        %473 = vst [vmem:[%s205 + $0x38] sm:$0xff] %v423
        %474 = vst [vmem:[%s205 + $0x40] sm:$0xff] %v428
        %475 = vst [vmem:[%s205 + $0x48] sm:$0xff] %v433
        %476 = vst [vmem:[%s205 + $0x50] sm:$0xff] %v438
        %477 = vst [vmem:[%s205 + $0x58] sm:$0xff] %v443
        %478 = vst [vmem:[%s205 + $0x60] sm:$0xff] %v448
        %479 = vst [vmem:[%s205 + $0x68] sm:$0xff] %v453
        %480 = vst [vmem:[%s205 + $0x70] sm:$0xff] %v458
        %481 = vst [vmem:[%s205 + $0x78] sm:$0xff] %v463
        %s482 = sand.u32 %s114, 1
        %s483 = scalar_lea.sflag [#allocation5], %s482
        %s484 = sand.u32 %s114, 1
        %s485 = smul.addr %s484, 128
        %s486 = scalar_lea.vmem [#allocation4], %s485
        // Predicated region
        $region33: #{tpu_custom_call.1} parent=31 // pred_check
          %p487 = pneg %p124
        $region34: #{tpu_custom_call.1} parent=31 // pred_check_branch
          %489 = sbr.rel (%p487) target = $region36
        $region35: #{tpu_custom_call.1} parent=31 // pred_region
          %s490 = smul.u32 16, %s23
          %s491 = ssub.s32 25, %s490
          %p492 = scmp.lt.s32.totalorder %s491, 16
          %s493 = scalar_select %p492, %s491, 16
          %s494 = smul.u32 128, %s493
          %s496 = ssub.s32 2048, %s494
          %497 = vsyncadd %s483, %s496
          %p498 = scmp.ne.s32.totalorder 0, %s494
          %s499 = smul.addr %s490, 3
          %s500 = sadd.s32 %s24, %s499
          %s501 = smul.addr %s500, 128
          %s502 = scalar_lea.hbm %s4, %s501
          %s503 = smul.u32 8, %s493
          %s504 = sshll.u32 %s486, 4
          %s505 = int_to_ptr.vmem [resolvable:$true] %s504
          %s506 = sshll.u32 %s503, 4
          %510 = dma.vmem_to_hbm [thread:$0]  (%p498), %s505, %s506, %s502, %s483, 128, 384, 8
        $region36: #{tpu_custom_call.1} parent=31 // pred_fallthru
          _
      $region32: #{tpu_custom_call.1} parent=5 // pred_fallthru
        _
      %p511 = scmp.le.s32.totalorder 2, %s14
      // Predicated region
      $region37: #{tpu_custom_call.1} parent=5 // pred_check
        %p512 = pneg %p511
      $region38: #{tpu_custom_call.1} parent=5 // pred_check_branch
        %514 = sbr.rel (%p512) target = $region40
      $region39: #{tpu_custom_call.1} parent=5 // pred_region
        %s515 = ssub.s32 %s14, 2
        // Predicated region
        $region41: #{tpu_custom_call.1} parent=39 // pred_check
          %p516 = pneg %p130
        $region42: #{tpu_custom_call.1} parent=39 // pred_check_branch
          %518 = sbr.rel (%p516) target = $region44
        $region43: #{tpu_custom_call.1} parent=39 // pred_region
          %s519 = sand.u32 %s115, 1
          %s520 = scalar_lea.sflag [#allocation5], %s519
          %s521 = sand.u32 %s115, 1
          %s522 = smul.addr %s521, 128
          %s523 = scalar_lea.vmem [#allocation4], %s522
          %524 = dma.done %s520, 2048
        $region44: #{tpu_custom_call.1} parent=39 // pred_fallthru
          _
      $region40: #{tpu_custom_call.1} parent=5 // pred_fallthru
        _
    $region6: #{tpu_custom_call.1} parent=1 // loop_footer
      %s18 = sadd.s32 1, %s14
    $region7: #{tpu_custom_call.1} parent=1 // loop_footer_branch
      %13 = sbr.rel target = $region3
    $region8: #{tpu_custom_call.1} parent=1 // loop_exit
      _
    %525 = vsyncpa [#allocation5], 1
    %s526 = scalar_lea.sflag [#allocation5], 1
    %527 = vsyncpa %s526, 1

</llo_original>
